<compile_context>
chip_gen: v7x
topology: tpu7x:2x2x1
jax: 0.10.0
libtpu: 0.0.40
codegen_flags: <defaults>
</compile_context>

<pallas_src>
import math
import numpy as np
import jax
import jax.numpy as jnp
from jax.experimental import pallas as pl
from jax.experimental.pallas import tpu as pltpu


def _round_up(v, m):
    return ((v + m - 1) // m) * m


def lemma_encoder_kernel(
    niter_ref,                      # SMEM (T,) int32 scalar-prefetch: #levels per tree
    wiou_ref,                       # (Np, 3Dp) f32 : x@W_iou + b_iou (gate-padded)
    node_ord_ref,                   # (Np, 1) int32 : node level, -1 for padding
    chi_ref,                        # (L, E, 1) int32 : per-level child idx (pad -> 0)
    par_ref,                        # (L, 1, E) int32 : per-level parent idx (pad -> -1)
    wfp_ref,                        # (L, E, Dp) f32 : x[parent]@W_f + b_f per edge
    uiou_ref,                       # (Dp, 3Dp) bf16
    uf_ref,                         # (Dp, Dp)  bf16
    h_ref,                          # out (Np, Dp) f32
    hc_s):                          # scratch (Np, 2Dp) f32 : [h | c]
    Np, Dp = h_ref.shape
    E = chi_ref.shape[1]
    tree = pl.program_id(0)

    # ---------- t = 0 : leaves ----------
    wiou0 = wiou_ref[...]
    wi0 = wiou0[:, :Dp]
    wo0 = wiou0[:, Dp:2 * Dp]
    wu0 = wiou0[:, 2 * Dp:]
    c0 = jax.nn.sigmoid(wi0) * jnp.tanh(wu0)
    h0 = jax.nn.sigmoid(wo0) * jnp.tanh(c0)
    hc0 = jnp.concatenate([h0, c0], axis=1)                               # (Np, 2Dp)
    hc_s[...] = jnp.where(node_ord_ref[...] == 0, hc0, jnp.zeros_like(hc0))

    n_iters = niter_ref[tree]

    # ---------- t = 1 .. n_iters-1 : child-sum TreeLSTM (inherently sequential) ----------
    def step(t, carry):
        lvl = t - 1
        chi = chi_ref[lvl]                                                # (E, 1)
        par = par_ref[lvl]                                                # (1, E)
        wfp = wfp_ref[lvl]                                                # (E, Dp)
        hc = hc_s[...]                                                    # (Np, 2Dp)

        # Per-level one-hots only (E << total edges); padded edges: parent = -1
        # never matches any node, so they are exactly inert -- no level mask needed.
        child_oh = jnp.where(
            chi == jax.lax.broadcasted_iota(jnp.int32, (E, Np), 1),
            1.0, 0.0).astype(jnp.bfloat16)                                # (E, Np)
        child_hc = jnp.dot(child_oh, hc.astype(jnp.bfloat16),
                           preferred_element_type=jnp.float32)            # (E, 2Dp)
        child_h = child_hc[:, :Dp]
        child_c = child_hc[:, Dp:]

        f = jax.nn.sigmoid(wfp + jnp.dot(child_h.astype(jnp.bfloat16), uf_ref[...],
                                         preferred_element_type=jnp.float32))
        fc = f * child_c
        gath = jnp.concatenate([child_h, fc], axis=1).astype(jnp.bfloat16)  # (E, 2Dp)

        parent_oh = jnp.where(
            par == jax.lax.broadcasted_iota(jnp.int32, (Np, E), 0),
            1.0, 0.0).astype(jnp.bfloat16)                                # (Np, E)
        sums = jnp.dot(parent_oh, gath, preferred_element_type=jnp.float32)  # (Np, 2Dp)
        h_sum = sums[:, :Dp]
        c_sum = sums[:, Dp:]

        # Fused recurrent projection for i|o|u.
        uiou = jnp.dot(h_sum.astype(jnp.bfloat16), uiou_ref[...],
                       preferred_element_type=jnp.float32)                # (Np, 3Dp)
        i_t = jax.nn.sigmoid(wiou_ref[:, :Dp] + uiou[:, :Dp])
        o_t = jax.nn.sigmoid(wiou_ref[:, Dp:2 * Dp] + uiou[:, Dp:2 * Dp])
        u_t = jnp.tanh(wiou_ref[:, 2 * Dp:] + uiou[:, 2 * Dp:])
        c_new = i_t * u_t + c_sum
        h_new = o_t * jnp.tanh(c_new)

        nmask = node_ord_ref[...] == t                                    # (Np, 1)
        hc_s[...] = jnp.where(nmask, jnp.concatenate([h_new, c_new], axis=1), hc)
        return carry

    jax.lax.fori_loop(1, n_iters, step, 0)

    # Single lane-dense store of the hidden state.
    h_ref[...] = hc_s[:, :Dp]


def lemma_encoder_forward(features, node_order, adjacency_list, edge_order, tree_sizes, params):
    """XLA-side embeddings/PE/projections + per-tree, per-level packing + one pallas_call."""
    features = np.asarray(features, np.int32)
    node_order = np.asarray(node_order, np.int32)
    adjacency_list = np.asarray(adjacency_list, np.int32).reshape(-1, 2)
    edge_order = np.asarray(edge_order, np.int32)
    tree_sizes = np.asarray(tree_sizes, np.int64)

    N = features.shape[0]
    T = int(tree_sizes.shape[0])
    offsets = np.concatenate([np.zeros(1, np.int64), np.cumsum(tree_sizes)])

    D = int(params['tree_dim'])
    P = int(params['pos_dim'])
    Dp = _round_up(D, 128)

    # ---------- XLA side: embeddings + positional encoding + input projections ----------
    emb = jnp.asarray(params['emb'], jnp.float32)
    semb = jnp.asarray(params['sort_emb'], jnp.float32)
    tok = jnp.take(emb, jnp.asarray(features[:, 0], jnp.int32), axis=0)
    srt = jnp.take(semb, jnp.asarray(features[:, 1], jnp.int32), axis=0)

    pos = features[:, 2].astype(np.float32)
    div_term = np.exp(np.arange(0, P, 2, dtype=np.float32) * (-math.log(10000.0) / P))
    ang = pos[:, None] * div_term[None, :]
    pe = np.zeros((N, P), np.float32)
    pe[:, 0::2] = np.sin(ang)[:, :pe[:, 0::2].shape[1]]
    pe[:, 1::2] = np.cos(ang)[:, :pe[:, 1::2].shape[1]]

    x = jnp.concatenate([tok, srt, jnp.asarray(pe)], axis=1)              # (N, F)

    W_iou = jnp.asarray(params['W_iou'], jnp.float32)
    b_iou = jnp.asarray(params['b_iou'], jnp.float32)
    W_f = jnp.asarray(params['W_f'], jnp.float32)
    b_f = jnp.asarray(params['b_f'], jnp.float32)

    wiou_all = x @ W_iou + b_iou                                          # (N, 3D)
    wf_all = x @ W_f + b_f                                                # (N, D)

    def padc(a, w):
        return jnp.pad(a, ((0, 0), (0, w - a.shape[1])))

    # Gate-pad each of i|o|u to Dp (padded columns provably stay exactly 0 in h/c).
    wiou_pad = jnp.concatenate([padc(wiou_all[:, :D], Dp),
                                padc(wiou_all[:, D:2 * D], Dp),
                                padc(wiou_all[:, 2 * D:], Dp)], axis=1)   # (N, 3Dp)
    wf_pad = padc(wf_all, Dp)                                             # (N, Dp)

    # ---------- per-tree / per-level packing (host-side bookkeeping) ----------
    n_iters = np.ones(T, np.int32)
    for ti in range(T):
        seg = node_order[offsets[ti]:offsets[ti + 1]]
        n_iters[ti] = int(seg.max()) + 1 if seg.size else 1
    L = max(1, int(n_iters.max()) - 1)
    Np = _round_up(int(tree_sizes.max()) if T else 1, 8)

    edge_tree = (np.searchsorted(offsets, adjacency_list[:, 0], side='right') - 1
                 if adjacency_list.shape[0] else np.zeros(0, np.int64))

    max_level_edges = 1
    for ti in range(T):
        em = np.where(edge_tree == ti)[0]
        for lv in range(1, int(n_iters[ti])):
            max_level_edges = max(max_level_edges, int(np.sum(edge_order[em] == lv)))
    E = _round_up(max_level_edges, 8)

    node_ord_arr = np.full((T, Np, 1), -1, np.int32)
    chi_arr = np.zeros((T, L, E, 1), np.int32)          # padded child -> node 0 (inert)
    par_arr = np.full((T, L, 1, E), -1, np.int32)       # padded parent -> -1 (scatters nothing)
    node_gather = np.full((T, Np), N, np.int64)         # index N = all-zero dummy row
    edge_parent_gather = np.full((T, L, E), N, np.int64)

    for ti in range(T):
        s, e = int(offsets[ti]), int(offsets[ti + 1])
        size = e - s
        node_ord_arr[ti, :size, 0] = node_order[s:e]
        node_gather[ti, :size] = np.arange(s, e)
        em = np.where(edge_tree == ti)[0]
        for lv in range(1, int(n_iters[ti])):
            sel = em[edge_order[em] == lv]
            cnt = sel.size
            if cnt == 0:
                continue
            chi_arr[ti, lv - 1, :cnt, 0] = adjacency_list[sel, 1] - s
            par_arr[ti, lv - 1, 0, :cnt] = adjacency_list[sel, 0] - s
            edge_parent_gather[ti, lv - 1, :cnt] = adjacency_list[sel, 0]

    # Per-tree padded node projections and per-edge parent W_f projections (XLA gathers).
    wiou_ext = jnp.concatenate([wiou_pad, jnp.zeros((1, 3 * Dp), jnp.float32)], axis=0)
    wf_ext = jnp.concatenate([wf_pad, jnp.zeros((1, Dp), jnp.float32)], axis=0)
    wiou_tree = jnp.take(wiou_ext, jnp.asarray(node_gather.reshape(-1), jnp.int32),
                         axis=0).reshape(T, Np, 3 * Dp)
    wfp_tree = jnp.take(wf_ext, jnp.asarray(edge_parent_gather.reshape(-1), jnp.int32),
                        axis=0).reshape(T, L, E, Dp)

    # Recurrent weights, gate-padded, bf16 for the MXU (0-padding exact).
    U_iou = np.asarray(params['U_iou'], np.float32)
    U_f = np.asarray(params['U_f'], np.float32)

    def pad2(m, rows, cols):
        return np.pad(np.asarray(m, np.float32),
                      ((0, rows - m.shape[0]), (0, cols - m.shape[1])))

    U_iou_p = np.concatenate([pad2(U_iou[:, :D], Dp, Dp),
                              pad2(U_iou[:, D:2 * D], Dp, Dp),
                              pad2(U_iou[:, 2 * D:], Dp, Dp)], axis=1)    # (Dp, 3Dp)
    U_f_p = pad2(U_f, Dp, Dp)                                             # (Dp, Dp)

    # ---------- VMEM budget derived from actual buffer sizes ----------
    in_bytes = (Np * 3 * Dp * 4 + Np * 4 + L * E * 4 + L * E * 4 + L * E * Dp * 4
                + Dp * 3 * Dp * 2 + Dp * Dp * 2)
    out_bytes = Np * Dp * 4
    scratch_bytes = Np * 2 * Dp * 4
    needed = 2 * (in_bytes + out_bytes) + scratch_bytes + (2 << 20)
    phys_vmem = 64 * 1024 * 1024                      # v7x-safe default
    try:
        phys_vmem = int(getattr(pltpu.get_tpu_info(), 'vmem_capacity_bytes', phys_vmem))
    except Exception:
        pass
    vmem_budget = int(min(max(needed, 8 << 20), phys_vmem))

    grid_spec = pltpu.PrefetchScalarGridSpec(
        num_scalar_prefetch=1,
        grid=(T,),
        in_specs=[
            pl.BlockSpec((None, Np, 3 * Dp), lambda t, ns: (t, 0, 0)),
            pl.BlockSpec((None, Np, 1), lambda t, ns: (t, 0, 0)),
            pl.BlockSpec((None, L, E, 1), lambda t, ns: (t, 0, 0, 0)),
            pl.BlockSpec((None, L, 1, E), lambda t, ns: (t, 0, 0, 0)),
            pl.BlockSpec((None, L, E, Dp), lambda t, ns: (t, 0, 0, 0)),
            pl.BlockSpec((Dp, 3 * Dp), lambda t, ns: (0, 0)),
            pl.BlockSpec((Dp, Dp), lambda t, ns: (0, 0)),
        ],
        out_specs=pl.BlockSpec((None, Np, Dp), lambda t, ns: (t, 0, 0)),
        scratch_shapes=[pltpu.VMEM((Np, 2 * Dp), jnp.float32)],
    )

    h_full = pl.pallas_call(
        lemma_encoder_kernel,
        out_shape=jax.ShapeDtypeStruct((T, Np, Dp), jnp.float32),
        grid_spec=grid_spec,
        compiler_params=pltpu.CompilerParams(
            dimension_semantics=("parallel",),       # independent trees -> megacore sharding
            vmem_limit_bytes=vmem_budget),
    )(
        jnp.asarray(n_iters, jnp.int32),
        wiou_tree,
        jnp.asarray(node_ord_arr),
        jnp.asarray(chi_arr),
        jnp.asarray(par_arr),
        wfp_tree,
        jnp.asarray(U_iou_p, jnp.bfloat16),
        jnp.asarray(U_f_p, jnp.bfloat16),
    )

    # TLUtil.stack_last_h: root of each tree is the last node of its segment.
    root_local = jnp.asarray(tree_sizes - 1, jnp.int32)
    return h_full[jnp.arange(T), root_local][:, :D]


def reference_forward(features, node_order, adjacency_list, edge_order, tree_sizes, params):
    """Pure numpy reference mirroring the PyTorch LemmaEncoder / child-sum TreeLSTM."""
    def sig(z):
        return 1.0 / (1.0 + np.exp(-z))

    features = np.asarray(features)
    node_order = np.asarray(node_order)
    parent_all = np.asarray(adjacency_list)[:, 0]
    child_all = np.asarray(adjacency_list)[:, 1]
    edge_order = np.asarray(edge_order)

    emb = np.asarray(params['emb'], np.float32)
    semb = np.asarray(params['sort_emb'], np.float32)
    Wiou = np.asarray(params['W_iou'], np.float32)
    biou = np.asarray(params['b_iou'], np.float32)
    Uiou = np.asarray(params['U_iou'], np.float32)
    Wf = np.asarray(params['W_f'], np.float32)
    bf = np.asarray(params['b_f'], np.float32)
    Uf = np.asarray(params['U_f'], np.float32)
    D = int(params['tree_dim'])
    P = int(params['pos_dim'])

    tok = emb[features[:, 0]]
    srt = semb[features[:, 1]]
    pos = features[:, 2].astype(np.float32)
    div_term = np.exp(np.arange(0, P, 2, dtype=np.float32) * (-math.log(10000.0) / P))
    ang = pos[:, None] * div_term[None, :]
    pe = np.zeros((features.shape[0], P), np.float32)
    pe[:, 0::2] = np.sin(ang)[:, :pe[:, 0::2].shape[1]]
    pe[:, 1::2] = np.cos(ang)[:, :pe[:, 1::2].shape[1]]
    x = np.concatenate([tok, srt, pe], axis=1).astype(np.float32)

    N = x.shape[0]
    h = np.zeros((N, D), np.float32)
    c = np.zeros((N, D), np.float32)
    for t in range(int(node_order.max()) + 1):
        nm = node_order == t
        if t == 0:
            iou = x[nm] @ Wiou + biou
            i, o, u = sig(iou[:, :D]), sig(iou[:, D:2 * D]), np.tanh(iou[:, 2 * D:])
            c[nm] = i * u
            h[nm] = o * np.tanh(c[nm])
        else:
            em = edge_order == t
            p_idx = parent_all[em]
            ch_idx = child_all[em]
            child_h = h[ch_idx]
            child_c = c[ch_idx]
            active = np.where(nm)[0]
            h_sum = np.zeros((active.size, D), np.float32)
            c_sum = np.zeros((active.size, D), np.float32)
            f = sig(x[p_idx] @ Wf + bf + child_h @ Uf)
            fc = f * child_c
            for j, n in enumerate(active):
                sel = p_idx == n
                h_sum[j] = child_h[sel].sum(0)
                c_sum[j] = fc[sel].sum(0)
            iou = x[nm] @ Wiou + biou + h_sum @ Uiou
            i, o, u = sig(iou[:, :D]), sig(iou[:, D:2 * D]), np.tanh(iou[:, 2 * D:])
            c[nm] = i * u + c_sum
            h[nm] = o * np.tanh(c[nm])
    offs = np.cumsum(np.asarray(tree_sizes)) - 1
    return h[offs]


if __name__ == "__main__":
    # small config consistent with LemmaEncoder(vocab_size, sort_vocab_size, ...)
    VOCAB, SORT_VOCAB = 32, 8
    EMB_DIM, POS_DIM, TREE_DIM = 8, 16, 8          # const_emb_dim = 0 (default)
    F = 2 * EMB_DIM + POS_DIM                       # treelstm_input_size = 32

    # two trees, roots last in their segments (matches stack_last_h)
    #  tree A: leaves 0,1,2 ; node 3 <- {0,1} ; root 4 <- {3,2}
    #  tree B: leaves 5,6   ; root 7 <- {5,6}
    node_order = np.array([0, 0, 0, 1, 2, 0, 0, 1], np.int32)
    adjacency_list = np.array([[3, 0], [3, 1], [4, 3], [4, 2], [7, 5], [7, 6]], np.int32)
    edge_order = np.array([1, 1, 2, 2, 1, 1], np.int32)
    tree_sizes = [5, 3]
    N = node_order.shape[0]

    key = jax.random.PRNGKey(0)
    k_tok, k_srt, k_pos, k0, k1, k2, k3, k4, k5, k6, k7 = jax.random.split(key, 11)
    tok_feat = np.asarray(jax.random.randint(k_tok, (N,), 0, VOCAB), np.int32)
    srt_feat = np.asarray(jax.random.randint(k_srt, (N,), 0, SORT_VOCAB), np.int32)
    pos_feat = np.asarray(jax.random.randint(k_pos, (N,), 0, 50), np.int32)
    features = np.stack([tok_feat, srt_feat, pos_feat], axis=1).astype(np.int32)   # (N, 3)

    kw = 1.0 / math.sqrt(F)
    ku = 1.0 / math.sqrt(TREE_DIM)
    params = {
        'emb': jax.random.normal(k0, (VOCAB, EMB_DIM), jnp.float32) * 0.1,
        'sort_emb': jax.random.normal(k1, (SORT_VOCAB, EMB_DIM), jnp.float32) * 0.1,
        'W_iou': jax.random.uniform(k2, (F, 3 * TREE_DIM), jnp.float32, -kw, kw),
        'b_iou': jax.random.uniform(k3, (3 * TREE_DIM,), jnp.float32, -kw, kw),
        'U_iou': jax.random.uniform(k4, (TREE_DIM, 3 * TREE_DIM), jnp.float32, -ku, ku),
        'W_f': jax.random.uniform(k5, (F, TREE_DIM), jnp.float32, -kw, kw),
        'b_f': jax.random.uniform(k6, (TREE_DIM,), jnp.float32, -kw, kw),
        'U_f': jax.random.uniform(k7, (TREE_DIM, TREE_DIM), jnp.float32, -ku, ku),
        'tree_dim': TREE_DIM,
        'pos_dim': POS_DIM,
        'emb_dim': EMB_DIM,
    }

    h_root = lemma_encoder_forward(features, node_order, adjacency_list, edge_order,
                                   tree_sizes, params)
    h_root = jax.block_until_ready(h_root)

    ref = reference_forward(features, node_order, adjacency_list, edge_order,
                            tree_sizes, params)
    if not np.allclose(np.asarray(h_root), ref, atol=1e-2, rtol=1e-2):
        raise AssertionError(f"mismatch:\nkernel=\n{np.asarray(h_root)}\nref=\n{ref}")

    print("KERNEL_OK")
</pallas_src>

<mosaic_0001>
module attributes {stable_mosaic.version = 11 : i64} {
  func.func @lemma_encoder_kernel(%arg0: i32, %arg1: memref<2xi32, #tpu.memory_space<smem>>, %arg2: memref<1x8x384xf32, #tpu.memory_space<vmem>>, %arg3: memref<1x8x1xi32, #tpu.memory_space<vmem>>, %arg4: memref<1x2x8x1xi32, #tpu.memory_space<vmem>>, %arg5: memref<1x2x1x8xi32, #tpu.memory_space<vmem>>, %arg6: memref<1x2x8x128xf32, #tpu.memory_space<vmem>>, %arg7: memref<128x384xbf16, #tpu.memory_space<vmem>>, %arg8: memref<128x128xbf16, #tpu.memory_space<vmem>>, %arg9: memref<1x8x128xf32, #tpu.memory_space<vmem>>, %arg10: memref<8x256xf32, #tpu.memory_space<vmem>>) attributes {dimension_semantics = [#tpu.dimension_semantics<parallel>], iteration_bounds = array<i64: 2>, scalar_prefetch = 1 : i64, scratch_operands = 1 : i64, tpu.core_type = #tpu.core_type<tc>, window_params = [{transform_indices = @transform_0, window_bounds = array<i64: 1, 8, 384>}, {transform_indices = @transform_1, window_bounds = array<i64: 1, 8, 1>}, {transform_indices = @transform_2, window_bounds = array<i64: 1, 2, 8, 1>}, {transform_indices = @transform_3, window_bounds = array<i64: 1, 2, 1, 8>}, {transform_indices = @transform_4, window_bounds = array<i64: 1, 2, 8, 128>}, {pipeline_mode = #tpu.pipeline_mode<synchronous>, transform_indices = @transform_5, window_bounds = array<i64: 128, 384>}, {pipeline_mode = #tpu.pipeline_mode<synchronous>, transform_indices = @transform_6, window_bounds = array<i64: 128, 128>}, {transform_indices = @transform_7, window_bounds = array<i64: 1, 8, 128>}]} {
    %c0 = arith.constant 0 : index
    %c0_0 = arith.constant 0 : index
    %c0_1 = arith.constant 0 : index
    %0 = vector.load %arg2[%c0, %c0_0, %c0_1] : memref<1x8x384xf32, #tpu.memory_space<vmem>>, vector<1x8x384xf32>
    %1 = vector.shape_cast %0 : vector<1x8x384xf32> to vector<8x384xf32>
    %2 = vector.extract_strided_slice %1 {offsets = [0, 0], sizes = [8, 128], strides = [1, 1]} : vector<8x384xf32> to vector<8x128xf32>
    %3 = vector.extract_strided_slice %1 {offsets = [0, 128], sizes = [8, 128], strides = [1, 1]} : vector<8x384xf32> to vector<8x128xf32>
    %4 = vector.extract_strided_slice %1 {offsets = [0, 256], sizes = [8, 128], strides = [1, 1]} : vector<8x384xf32> to vector<8x128xf32>
    %5 = arith.negf %2 : vector<8x128xf32>
    %6 = math.exp %5 : vector<8x128xf32>
    %cst = arith.constant 1.000000e+00 : f32
    %7 = vector.broadcast %cst : f32 to vector<8x128xf32>
    %8 = arith.addf %7, %6 : vector<8x128xf32>
    %9 = arith.divf %7, %8 : vector<8x128xf32>
    %10 = math.tanh %4 : vector<8x128xf32>
    %11 = arith.mulf %9, %10 : vector<8x128xf32>
    %12 = arith.negf %3 : vector<8x128xf32>
    %13 = math.exp %12 : vector<8x128xf32>
    %cst_2 = arith.constant 1.000000e+00 : f32
    %14 = vector.broadcast %cst_2 : f32 to vector<8x128xf32>
    %15 = arith.addf %14, %13 : vector<8x128xf32>
    %16 = arith.divf %14, %15 : vector<8x128xf32>
    %17 = math.tanh %11 : vector<8x128xf32>
    %18 = arith.mulf %16, %17 : vector<8x128xf32>
    %19 = tpu.concatenate %18, %11 in 1 : vector<8x128xf32>, vector<8x128xf32> -> vector<8x256xf32>
    %c0_3 = arith.constant 0 : index
    %c0_4 = arith.constant 0 : index
    %c0_5 = arith.constant 0 : index
    %20 = vector.load %arg3[%c0_3, %c0_4, %c0_5] : memref<1x8x1xi32, #tpu.memory_space<vmem>>, vector<1x8x1xi32>
    %21 = vector.shape_cast %20 : vector<1x8x1xi32> to vector<8x1xi32>
    %c0_i32 = arith.constant 0 : i32
    %22 = vector.broadcast %c0_i32 : i32 to vector<8x1xi32>
    %23 = arith.cmpi eq, %21, %22 : vector<8x1xi32>
    %cst_6 = arith.constant 0.000000e+00 : f32
    %24 = vector.broadcast %cst_6 : f32 to vector<8x256xf32>
    %25 = vector.shape_cast %23 : vector<8x1xi1> to vector<8x1xi1>
    %26 = vector.broadcast %25 : vector<8x1xi1> to vector<8x256xi1>
    %27 = arith.select %26, %19, %24 : vector<8x256xi1>, vector<8x256xf32>
    %c0_7 = arith.constant 0 : index
    %c0_8 = arith.constant 0 : index
    %28 = vector.load %arg10[%c0_7, %c0_8] : memref<8x256xf32, #tpu.memory_space<vmem>>, vector<8x256xf32>
    tpu.vector_store %arg10[%c0_7, %c0_8], %27 {strides = array<i32>} : memref<8x256xf32, #tpu.memory_space<vmem>>, vector<8x256xf32>,
    %29 = arith.index_cast %arg0 : i32 to index
    %30 = memref.load %arg1[%29] : memref<2xi32, #tpu.memory_space<smem>>
    %c0_i32_9 = arith.constant 0 : i32
    %c1_i32 = arith.constant 1 : i32
    %31 = arith.subi %30, %c1_i32 : i32
    %32 = arith.addi %c1_i32, %31 : i32
    %c1_i32_10 = arith.constant 1 : i32
    scf.for %arg11 = %c1_i32 to %32 step %c1_i32_10  : i32 {
      %c1_i32_16 = arith.constant 1 : i32
      %37 = arith.subi %arg11, %c1_i32_16 : i32
      %c0_17 = arith.constant 0 : index
      %38 = arith.index_cast %37 : i32 to index
      %c0_18 = arith.constant 0 : index
      %c0_19 = arith.constant 0 : index
      %39 = vector.load %arg4[%c0_17, %38, %c0_18, %c0_19] : memref<1x2x8x1xi32, #tpu.memory_space<vmem>>, vector<1x1x8x1xi32>
      %40 = vector.shape_cast %39 : vector<1x1x8x1xi32> to vector<8x1xi32>
      %c0_20 = arith.constant 0 : index
      %41 = arith.index_cast %37 : i32 to index
      %c0_21 = arith.constant 0 : index
      %c0_22 = arith.constant 0 : index
      %42 = vector.load %arg5[%c0_20, %41, %c0_21, %c0_22] : memref<1x2x1x8xi32, #tpu.memory_space<vmem>>, vector<1x1x1x8xi32>
      %43 = vector.shape_cast %42 : vector<1x1x1x8xi32> to vector<1x8xi32>
      %c0_23 = arith.constant 0 : index
      %44 = arith.index_cast %37 : i32 to index
      %c0_24 = arith.constant 0 : index
      %c0_25 = arith.constant 0 : index
      %45 = vector.load %arg6[%c0_23, %44, %c0_24, %c0_25] : memref<1x2x8x128xf32, #tpu.memory_space<vmem>>, vector<1x1x8x128xf32>
      %46 = vector.shape_cast %45 : vector<1x1x8x128xf32> to vector<8x128xf32>
      %c0_26 = arith.constant 0 : index
      %c0_27 = arith.constant 0 : index
      %47 = vector.load %arg10[%c0_26, %c0_27] : memref<8x256xf32, #tpu.memory_space<vmem>>, vector<8x256xf32>
      %48 = tpu.iota {dimensions = array<i32: 1>} : vector<8x8xi32>
      %49 = vector.broadcast %40 : vector<8x1xi32> to vector<8x8xi32>
      %50 = arith.cmpi eq, %49, %48 : vector<8x8xi32>
      %cst_28 = arith.constant 1.000000e+00 : f32
      %cst_29 = arith.constant 0.000000e+00 : f32
      %51 = vector.broadcast %cst_28 : f32 to vector<8x8xf32>
      %52 = vector.broadcast %cst_29 : f32 to vector<8x8xf32>
      %53 = arith.select %50, %51, %52 : vector<8x8xi1>, vector<8x8xf32>
      %54 = arith.truncf %53 : vector<8x8xf32> to vector<8x8xbf16>
      %55 = arith.truncf %47 : vector<8x256xf32> to vector<8x256xbf16>
      %cst_30 = arith.constant dense<0.000000e+00> : vector<8x256xf32>
      %56 = tpu.matmul %54, %55, %cst_30 {dimension_numbers = #tpu.dot_dimension_numbers<[1], [0], [0], [1], [0, 0, 1, 1], [], []>} : vector<8x8xbf16>, vector<8x256xbf16>, vector<8x256xf32> -> vector<8x256xf32>
      %57 = vector.extract_strided_slice %56 {offsets = [0, 0], sizes = [8, 128], strides = [1, 1]} : vector<8x256xf32> to vector<8x128xf32>
      %58 = vector.extract_strided_slice %56 {offsets = [0, 128], sizes = [8, 128], strides = [1, 1]} : vector<8x256xf32> to vector<8x128xf32>
      %59 = arith.truncf %57 : vector<8x128xf32> to vector<8x128xbf16>
      %c0_31 = arith.constant 0 : index
      %c0_32 = arith.constant 0 : index
      %60 = vector.load %arg8[%c0_31, %c0_32] : memref<128x128xbf16, #tpu.memory_space<vmem>>, vector<128x128xbf16>
      %cst_33 = arith.constant dense<0.000000e+00> : vector<8x128xf32>
      %61 = tpu.matmul %59, %60, %cst_33 {dimension_numbers = #tpu.dot_dimension_numbers<[1], [0], [0], [1], [0, 0, 1, 1], [], []>} : vector<8x128xbf16>, vector<128x128xbf16>, vector<8x128xf32> -> vector<8x128xf32>
      %62 = arith.addf %46, %61 : vector<8x128xf32>
      %63 = arith.negf %62 : vector<8x128xf32>
      %64 = math.exp %63 : vector<8x128xf32>
      %cst_34 = arith.constant 1.000000e+00 : f32
      %65 = vector.broadcast %cst_34 : f32 to vector<8x128xf32>
      %66 = arith.addf %65, %64 : vector<8x128xf32>
      %67 = arith.divf %65, %66 : vector<8x128xf32>
      %68 = arith.mulf %67, %58 : vector<8x128xf32>
      %69 = tpu.concatenate %57, %68 in 1 : vector<8x128xf32>, vector<8x128xf32> -> vector<8x256xf32>
      %70 = arith.truncf %69 : vector<8x256xf32> to vector<8x256xbf16>
      %71 = tpu.iota {dimensions = array<i32: 0>} : vector<8x8xi32>
      %72 = vector.broadcast %43 : vector<1x8xi32> to vector<8x8xi32>
      %73 = arith.cmpi eq, %72, %71 : vector<8x8xi32>
      %cst_35 = arith.constant 1.000000e+00 : f32
      %cst_36 = arith.constant 0.000000e+00 : f32
      %74 = vector.broadcast %cst_35 : f32 to vector<8x8xf32>
      %75 = vector.broadcast %cst_36 : f32 to vector<8x8xf32>
      %76 = arith.select %73, %74, %75 : vector<8x8xi1>, vector<8x8xf32>
      %77 = arith.truncf %76 : vector<8x8xf32> to vector<8x8xbf16>
      %cst_37 = arith.constant dense<0.000000e+00> : vector<8x256xf32>
      %78 = tpu.matmul %77, %70, %cst_37 {dimension_numbers = #tpu.dot_dimension_numbers<[1], [0], [0], [1], [0, 0, 1, 1], [], []>} : vector<8x8xbf16>, vector<8x256xbf16>, vector<8x256xf32> -> vector<8x256xf32>
      %79 = vector.extract_strided_slice %78 {offsets = [0, 0], sizes = [8, 128], strides = [1, 1]} : vector<8x256xf32> to vector<8x128xf32>
      %80 = vector.extract_strided_slice %78 {offsets = [0, 128], sizes = [8, 128], strides = [1, 1]} : vector<8x256xf32> to vector<8x128xf32>
      %81 = arith.truncf %79 : vector<8x128xf32> to vector<8x128xbf16>
      %c0_38 = arith.constant 0 : index
      %c0_39 = arith.constant 0 : index
      %82 = vector.load %arg7[%c0_38, %c0_39] : memref<128x384xbf16, #tpu.memory_space<vmem>>, vector<128x384xbf16>
      %cst_40 = arith.constant dense<0.000000e+00> : vector<8x384xf32>
      %83 = tpu.matmul %81, %82, %cst_40 {dimension_numbers = #tpu.dot_dimension_numbers<[1], [0], [0], [1], [0, 0, 1, 1], [], []>} : vector<8x128xbf16>, vector<128x384xbf16>, vector<8x384xf32> -> vector<8x384xf32>
      %c0_41 = arith.constant 0 : index
      %c0_42 = arith.constant 0 : index
      %c0_43 = arith.constant 0 : index
      %84 = vector.load %arg2[%c0_41, %c0_42, %c0_43] : memref<1x8x384xf32, #tpu.memory_space<vmem>>, vector<1x8x128xf32>
      %85 = vector.shape_cast %84 : vector<1x8x128xf32> to vector<8x128xf32>
      %86 = vector.extract_strided_slice %83 {offsets = [0, 0], sizes = [8, 128], strides = [1, 1]} : vector<8x384xf32> to vector<8x128xf32>
      %87 = arith.addf %85, %86 : vector<8x128xf32>
      %88 = arith.negf %87 : vector<8x128xf32>
      %89 = math.exp %88 : vector<8x128xf32>
      %cst_44 = arith.constant 1.000000e+00 : f32
      %90 = vector.broadcast %cst_44 : f32 to vector<8x128xf32>
      %91 = arith.addf %90, %89 : vector<8x128xf32>
      %92 = arith.divf %90, %91 : vector<8x128xf32>
      %c0_45 = arith.constant 0 : index
      %c0_46 = arith.constant 0 : index
      %c128 = arith.constant 128 : index
      %93 = vector.load %arg2[%c0_45, %c0_46, %c128] : memref<1x8x384xf32, #tpu.memory_space<vmem>>, vector<1x8x128xf32>
      %94 = vector.shape_cast %93 : vector<1x8x128xf32> to vector<8x128xf32>
      %95 = vector.extract_strided_slice %83 {offsets = [0, 128], sizes = [8, 128], strides = [1, 1]} : vector<8x384xf32> to vector<8x128xf32>
      %96 = arith.addf %94, %95 : vector<8x128xf32>
      %97 = arith.negf %96 : vector<8x128xf32>
      %98 = math.exp %97 : vector<8x128xf32>
      %cst_47 = arith.constant 1.000000e+00 : f32
      %99 = vector.broadcast %cst_47 : f32 to vector<8x128xf32>
      %100 = arith.addf %99, %98 : vector<8x128xf32>
      %101 = arith.divf %99, %100 : vector<8x128xf32>
      %c0_48 = arith.constant 0 : index
      %c0_49 = arith.constant 0 : index
      %c256 = arith.constant 256 : index
      %102 = vector.load %arg2[%c0_48, %c0_49, %c256] : memref<1x8x384xf32, #tpu.memory_space<vmem>>, vector<1x8x128xf32>
      %103 = vector.shape_cast %102 : vector<1x8x128xf32> to vector<8x128xf32>
      %104 = vector.extract_strided_slice %83 {offsets = [0, 256], sizes = [8, 128], strides = [1, 1]} : vector<8x384xf32> to vector<8x128xf32>
      %105 = arith.addf %103, %104 : vector<8x128xf32>
      %106 = math.tanh %105 : vector<8x128xf32>
      %107 = arith.mulf %92, %106 : vector<8x128xf32>
      %108 = arith.addf %107, %80 : vector<8x128xf32>
      %109 = math.tanh %108 : vector<8x128xf32>
      %110 = arith.mulf %101, %109 : vector<8x128xf32>
      %c0_50 = arith.constant 0 : index
      %c0_51 = arith.constant 0 : index
      %c0_52 = arith.constant 0 : index
      %111 = vector.load %arg3[%c0_50, %c0_51, %c0_52] : memref<1x8x1xi32, #tpu.memory_space<vmem>>, vector<1x8x1xi32>
      %112 = vector.shape_cast %111 : vector<1x8x1xi32> to vector<8x1xi32>
      %113 = vector.broadcast %arg11 : i32 to vector<8x1xi32>
      %114 = arith.cmpi eq, %112, %113 : vector<8x1xi32>
      %115 = tpu.concatenate %110, %108 in 1 : vector<8x128xf32>, vector<8x128xf32> -> vector<8x256xf32>
      %116 = vector.shape_cast %114 : vector<8x1xi1> to vector<8x1xi1>
      %117 = vector.broadcast %116 : vector<8x1xi1> to vector<8x256xi1>
      %118 = arith.select %117, %115, %47 : vector<8x256xi1>, vector<8x256xf32>
      %c0_53 = arith.constant 0 : index
      %c0_54 = arith.constant 0 : index
      %119 = vector.load %arg10[%c0_53, %c0_54] : memref<8x256xf32, #tpu.memory_space<vmem>>, vector<8x256xf32>
      tpu.vector_store %arg10[%c0_53, %c0_54], %118 {strides = array<i32>} : memref<8x256xf32, #tpu.memory_space<vmem>>, vector<8x256xf32>,
    }
    %c0_11 = arith.constant 0 : index
    %c0_12 = arith.constant 0 : index
    %33 = vector.load %arg10[%c0_11, %c0_12] : memref<8x256xf32, #tpu.memory_space<vmem>>, vector<8x128xf32>
    %c0_13 = arith.constant 0 : index
    %c0_14 = arith.constant 0 : index
    %c0_15 = arith.constant 0 : index
    %34 = vector.load %arg9[%c0_13, %c0_14, %c0_15] : memref<1x8x128xf32, #tpu.memory_space<vmem>>, vector<1x8x128xf32>
    %35 = vector.shape_cast %34 : vector<1x8x128xf32> to vector<8x128xf32>
    %36 = vector.shape_cast %33 : vector<8x128xf32> to vector<1x8x128xf32>
    tpu.vector_store %arg9[%c0_13, %c0_14, %c0_15], %36 {strides = array<i32>} : memref<1x8x128xf32, #tpu.memory_space<vmem>>, vector<1x8x128xf32>,
    return
  }
  func.func @transform_0(%arg0: i32, %arg1: memref<2xi32, #tpu.memory_space<smem>>) -> (i32, i32, i32) {
    %c0_i32 = arith.constant 0 : i32
    %c0_i32_0 = arith.constant 0 : i32
    %c0_i32_1 = arith.constant 0 : i32
    return %arg0, %c0_i32, %c0_i32_0 : i32, i32, i32
  }
  func.func @transform_1(%arg0: i32, %arg1: memref<2xi32, #tpu.memory_space<smem>>) -> (i32, i32, i32) {
    %c0_i32 = arith.constant 0 : i32
    %c0_i32_0 = arith.constant 0 : i32
    %c0_i32_1 = arith.constant 0 : i32
    return %arg0, %c0_i32, %c0_i32_0 : i32, i32, i32
  }
  func.func @transform_2(%arg0: i32, %arg1: memref<2xi32, #tpu.memory_space<smem>>) -> (i32, i32, i32, i32) {
    %c0_i32 = arith.constant 0 : i32
    %c0_i32_0 = arith.constant 0 : i32
    %c0_i32_1 = arith.constant 0 : i32
    %c0_i32_2 = arith.constant 0 : i32
    return %arg0, %c0_i32, %c0_i32_0, %c0_i32_1 : i32, i32, i32, i32
  }
  func.func @transform_3(%arg0: i32, %arg1: memref<2xi32, #tpu.memory_space<smem>>) -> (i32, i32, i32, i32) {
    %c0_i32 = arith.constant 0 : i32
    %c0_i32_0 = arith.constant 0 : i32
    %c0_i32_1 = arith.constant 0 : i32
    %c0_i32_2 = arith.constant 0 : i32
    return %arg0, %c0_i32, %c0_i32_0, %c0_i32_1 : i32, i32, i32, i32
  }
  func.func @transform_4(%arg0: i32, %arg1: memref<2xi32, #tpu.memory_space<smem>>) -> (i32, i32, i32, i32) {
    %c0_i32 = arith.constant 0 : i32
    %c0_i32_0 = arith.constant 0 : i32
    %c0_i32_1 = arith.constant 0 : i32
    %c0_i32_2 = arith.constant 0 : i32
    return %arg0, %c0_i32, %c0_i32_0, %c0_i32_1 : i32, i32, i32, i32
  }
  func.func @transform_5(%arg0: i32, %arg1: memref<2xi32, #tpu.memory_space<smem>>) -> (i32, i32) {
    %c0_i32 = arith.constant 0 : i32
    %c0_i32_0 = arith.constant 0 : i32
    %c0_i32_1 = arith.constant 0 : i32
    return %c0_i32, %c0_i32_0 : i32, i32
  }
  func.func @transform_6(%arg0: i32, %arg1: memref<2xi32, #tpu.memory_space<smem>>) -> (i32, i32) {
    %c0_i32 = arith.constant 0 : i32
    %c0_i32_0 = arith.constant 0 : i32
    %c0_i32_1 = arith.constant 0 : i32
    return %c0_i32, %c0_i32_0 : i32, i32
  }
  func.func @transform_7(%arg0: i32, %arg1: memref<2xi32, #tpu.memory_space<smem>>) -> (i32, i32, i32) {
    %c0_i32 = arith.constant 0 : i32
    %c0_i32_0 = arith.constant 0 : i32
    %c0_i32_1 = arith.constant 0 : i32
    return %arg0, %c0_i32, %c0_i32_0 : i32, i32, i32
  }
}

</mosaic_0001>

<llo_original>
// kernel: tpu_custom_call.1
$region0: #{tpu_custom_call.1}
  #allocation0 [shape = 'u32[]', space=smem, size = 0x4, offset = 0x4, fixed_abs, tag = 'smem constant byte address 0x4 - core index']
  #allocation1 [shape = 'u32[144,128]{1,0:T(1,128)}', space=vmem, size = 0x12000, scoped, tag = 'internal scratch']
  #allocation2 [shape = 'f32[8,256]{1,0:T(8,128)}', space=vmem, size = 0x2000, scoped, tag = 'scratch operand']
  #allocation3 [shape = 's32[1]{0}', space=sflag, size = 0x4, scoped, tag = 'scoped memory for tpu_custom_call.1']
  #allocation4 [shape = 'u8[512]{0}', space=smem, size = 0x200, scoped, tag = 'prefetched SMEM operand 0']
  %s0 = inlined_call_operand.vmem [shape: s32[2], index: 0, kind: input, shape index: {}]
  %s1 = inlined_call_operand.hbm [shape: f32[2,8,384], index: 1, kind: input, shape index: {}]
  %s2 = inlined_call_operand.vmem [shape: s32[2,8,1], index: 2, kind: input, shape index: {}]
  %s3 = inlined_call_operand.vmem [shape: s32[2,2,8,1], index: 3, kind: input, shape index: {}]
  %s4 = inlined_call_operand.vmem [shape: s32[2,2,1,8], index: 4, kind: input, shape index: {}]
  %s5 = inlined_call_operand.hbm [shape: f32[2,2,8,128], index: 5, kind: input, shape index: {}]
  %s6 = inlined_call_operand.hbm [shape: bf16[128,384], index: 6, kind: input, shape index: {}]
  %s7 = inlined_call_operand.vmem [shape: bf16[128,128], index: 7, kind: input, shape index: {}]
  %s8 = inlined_call_operand.hbm [shape: f32[2,8,128], index: 8, kind: output, shape index: {}]
  %s9 = sld [smem:[#allocation0]]
  $region80: #{tpu_custom_call.1} parent=0
    _
  %s11 = ssub.s32 1, %s9
  %s12 = scalar_select 0, %s11, %s9
  %s13 = sshll.u32 %s0, 4
  %s14 = int_to_ptr.vmem [resolvable:$true] %s13
  %16 = dma.vmem_to_smem %s14, 16, [#allocation4], [#allocation3]
  %17 = dma.done [#allocation3], 16
  %18 = sfence
  $region1: #{tpu_custom_call.1} parent=0
    #allocation5 [shape = 'u8[24576]{0}', space=vmem, size = 0x6000, scoped, tag = 'input window, operand 1']
    #allocation6 [shape = 's32[2]{0}', space=sflag, size = 0x8, scoped, tag = 'scoped memory for tpu_custom_call.1']
    #allocation7 [shape = 's32[2]{0}', space=sflag, size = 0x8, scoped, tag = 'scoped memory for tpu_custom_call.1']
    #allocation8 [shape = 'u8[16384]{0}', space=vmem, size = 0x4000, scoped, tag = 'input window, operand 5']
    #allocation9 [shape = 's32[2]{0}', space=sflag, size = 0x8, scoped, tag = 'scoped memory for tpu_custom_call.1']
    #allocation10 [shape = 'u8[98304]{0}', space=vmem, size = 0x18000, scoped, tag = 'input window, operand 6, single buffered']
    #allocation11 [shape = 'u8[8192]{0}', space=vmem, size = 0x2000, scoped, tag = 'output window, operand 0']
    %19 = vsyncpa [#allocation6], 0
    %s20 = scalar_lea.sflag [#allocation6], 1
    %21 = vsyncpa %s20, 0
    %22 = vsyncpa [#allocation9], 0
    %s23 = scalar_lea.sflag [#allocation9], 1
    %24 = vsyncpa %s23, 0
    %25 = vsyncpa [#allocation7], 0
    %s26 = scalar_lea.sflag [#allocation7], 1
    %27 = vsyncpa %s26, 0
    loop: start=0, step=1, limit=4
    $region2: #{tpu_custom_call.1} parent=1 // loop_pre_header
      _
    $region3: #{tpu_custom_call.1} parent=1 // loop_header
      %s29 = sphi 0, %s33
      %p30 = scmp.ge.s32.totalorder %s29, 4
      %s39 = sphi 0, %s41
      %s42 = sphi 0, %s39
      %s43 = sphi 0, %s42
      %s59 = sphi 0, %s43
      %s65 = sphi 0, %s67
      %s68 = sphi 0, %s65
      %s69 = sphi 0, %s68
      %s85 = sphi 0, %s69
      %s91 = sphi 0, %s93
      %s94 = sphi 0, %s91
      %s95 = sphi 0, %s94
      %s111 = sphi 0, %s95
      %s117 = sphi 0, %s119
      %s120 = sphi 0, %s117
      %s121 = sphi 0, %s120
      %s137 = sphi 0, %s121
      %s143 = sphi 0, %s145
      %s146 = sphi 0, %s143
      %s147 = sphi 0, %s146
      %s163 = sphi 0, %s147
      %s167 = sphi 0, %s167
      %s169 = sphi 0, %s167
      %s170 = sphi 0, %s169
      %s184 = sphi 0, %s170
      %s188 = sphi 0, %s188
      %s190 = sphi 0, %s188
      %s191 = sphi 0, %s190
      %s205 = sphi 0, %s191
      %s211 = sphi 0, %s213
      %s214 = sphi 0, %s211
      %s215 = sphi 0, %s214
      %s231 = sphi 0, %s215
    $region4: #{tpu_custom_call.1} parent=1 // loop_header_branch
      %32 = sbr.rel (%p30) target = $region8
    $region5: #{tpu_custom_call.1} parent=1 // loop_body
      %s34 = ssub.s32 %s29, 1
      %s35 = ssub.s32 %s29, 2
      %s36 = sadd.s32 %s29, 1
      %s37 = ssub.s32 %s29, %s36
      %p38 = scmp.eq.s32.totalorder %s37, 0
      %s40 = sadd.s32 %s39, 1
      %s41 = scalar_select %p38, %s39, %s40
      %p44 = pneg %p38
      %p45 = scmp.eq.s32.totalorder %s29, 1
      %p46 = por %p44, %p45
      %p47 = scmp.ne.s32.totalorder %s39, %s42
      %p48 = scmp.eq.s32.totalorder %s29, 0
      %p49 = por %p47, %p48
      %p50 = scmp.ne.s32.totalorder %s39, %s42
      %p51 = scmp.eq.s32.totalorder %s34, 1
      %p52 = por %p50, %p51
      %p53 = scmp.ne.s32.totalorder %s42, %s43
      %p54 = scmp.eq.s32.totalorder %s34, 0
      %p55 = por %p53, %p54
      %p56 = scmp.ne.s32.totalorder %s42, %s43
      %p57 = scmp.eq.s32.totalorder %s35, 1
      %p58 = por %p56, %p57
      %p60 = scmp.ne.s32.totalorder %s43, %s59
      %p61 = scmp.eq.s32.totalorder %s35, 0
      %p62 = por %p60, %p61
      %s63 = ssub.s32 %s29, %s36
      %p64 = scmp.eq.s32.totalorder %s63, 0
      %s66 = sadd.s32 %s65, 1
      %s67 = scalar_select %p64, %s65, %s66
      %p70 = pneg %p64
      %p71 = scmp.eq.s32.totalorder %s29, 1
      %p72 = por %p70, %p71
      %p73 = scmp.ne.s32.totalorder %s65, %s68
      %p74 = scmp.eq.s32.totalorder %s29, 0
      %p75 = por %p73, %p74
      %p76 = scmp.ne.s32.totalorder %s65, %s68
      %p77 = scmp.eq.s32.totalorder %s34, 1
      %p78 = por %p76, %p77
      %p79 = scmp.ne.s32.totalorder %s68, %s69
      %p80 = scmp.eq.s32.totalorder %s34, 0
      %p81 = por %p79, %p80
      %p82 = scmp.ne.s32.totalorder %s68, %s69
      %p83 = scmp.eq.s32.totalorder %s35, 1
      %p84 = por %p82, %p83
      %p86 = scmp.ne.s32.totalorder %s69, %s85
      %p87 = scmp.eq.s32.totalorder %s35, 0
      %p88 = por %p86, %p87
      %s89 = ssub.s32 %s29, %s36
      %p90 = scmp.eq.s32.totalorder %s89, 0
      %s92 = sadd.s32 %s91, 1
      %s93 = scalar_select %p90, %s91, %s92
      %p96 = pneg %p90
      %p97 = scmp.eq.s32.totalorder %s29, 1
      %p98 = por %p96, %p97
      %p99 = scmp.ne.s32.totalorder %s91, %s94
      %p100 = scmp.eq.s32.totalorder %s29, 0
      %p101 = por %p99, %p100
      %p102 = scmp.ne.s32.totalorder %s91, %s94
      %p103 = scmp.eq.s32.totalorder %s34, 1
      %p104 = por %p102, %p103
      %p105 = scmp.ne.s32.totalorder %s94, %s95
      %p106 = scmp.eq.s32.totalorder %s34, 0
      %p107 = por %p105, %p106
      %p108 = scmp.ne.s32.totalorder %s94, %s95
      %p109 = scmp.eq.s32.totalorder %s35, 1
      %p110 = por %p108, %p109
      %p112 = scmp.ne.s32.totalorder %s95, %s111
      %p113 = scmp.eq.s32.totalorder %s35, 0
      %p114 = por %p112, %p113
      %s115 = ssub.s32 %s29, %s36
      %p116 = scmp.eq.s32.totalorder %s115, 0
      %s118 = sadd.s32 %s117, 1
      %s119 = scalar_select %p116, %s117, %s118
      %p122 = pneg %p116
      %p123 = scmp.eq.s32.totalorder %s29, 1
      %p124 = por %p122, %p123
      %p125 = scmp.ne.s32.totalorder %s117, %s120
      %p126 = scmp.eq.s32.totalorder %s29, 0
      %p127 = por %p125, %p126
      %p128 = scmp.ne.s32.totalorder %s117, %s120
      %p129 = scmp.eq.s32.totalorder %s34, 1
      %p130 = por %p128, %p129
      %p131 = scmp.ne.s32.totalorder %s120, %s121
      %p132 = scmp.eq.s32.totalorder %s34, 0
      %p133 = por %p131, %p132
      %p134 = scmp.ne.s32.totalorder %s120, %s121
      %p135 = scmp.eq.s32.totalorder %s35, 1
      %p136 = por %p134, %p135
      %p138 = scmp.ne.s32.totalorder %s121, %s137
      %p139 = scmp.eq.s32.totalorder %s35, 0
      %p140 = por %p138, %p139
      %s141 = ssub.s32 %s29, %s36
      %p142 = scmp.eq.s32.totalorder %s141, 0
      %s144 = sadd.s32 %s143, 1
      %s145 = scalar_select %p142, %s143, %s144
      %p148 = pneg %p142
      %p149 = scmp.eq.s32.totalorder %s29, 1
      %p150 = por %p148, %p149
      %p151 = scmp.ne.s32.totalorder %s143, %s146
      %p152 = scmp.eq.s32.totalorder %s29, 0
      %p153 = por %p151, %p152
      %p154 = scmp.ne.s32.totalorder %s143, %s146
      %p155 = scmp.eq.s32.totalorder %s34, 1
      %p156 = por %p154, %p155
      %p157 = scmp.ne.s32.totalorder %s146, %s147
      %p158 = scmp.eq.s32.totalorder %s34, 0
      %p159 = por %p157, %p158
      %p160 = scmp.ne.s32.totalorder %s146, %s147
      %p161 = scmp.eq.s32.totalorder %s35, 1
      %p162 = por %p160, %p161
      %p164 = scmp.ne.s32.totalorder %s147, %s163
      %p165 = scmp.eq.s32.totalorder %s35, 0
      %p166 = por %p164, %p165
      %s168 = sadd.s32 %s167, 1
      %p171 = scmp.eq.s32.totalorder %s29, 1
      %p172 = scmp.ne.s32.totalorder %s167, %s169
      %p173 = scmp.eq.s32.totalorder %s29, 0
      %p174 = por %p172, %p173
      %p175 = scmp.ne.s32.totalorder %s167, %s169
      %p176 = scmp.eq.s32.totalorder %s34, 1
      %p177 = por %p175, %p176
      %p178 = scmp.ne.s32.totalorder %s169, %s170
      %p179 = scmp.eq.s32.totalorder %s34, 0
      %p180 = por %p178, %p179
      %p181 = scmp.ne.s32.totalorder %s169, %s170
      %p182 = scmp.eq.s32.totalorder %s35, 1
      %p183 = por %p181, %p182
      %p185 = scmp.ne.s32.totalorder %s170, %s184
      %p186 = scmp.eq.s32.totalorder %s35, 0
      %p187 = por %p185, %p186
      %s189 = sadd.s32 %s188, 1
      %p192 = scmp.eq.s32.totalorder %s29, 1
      %p193 = scmp.ne.s32.totalorder %s188, %s190
      %p194 = scmp.eq.s32.totalorder %s29, 0
      %p195 = por %p193, %p194
      %p196 = scmp.ne.s32.totalorder %s188, %s190
      %p197 = scmp.eq.s32.totalorder %s34, 1
      %p198 = por %p196, %p197
      %p199 = scmp.ne.s32.totalorder %s190, %s191
      %p200 = scmp.eq.s32.totalorder %s34, 0
      %p201 = por %p199, %p200
      %p202 = scmp.ne.s32.totalorder %s190, %s191
      %p203 = scmp.eq.s32.totalorder %s35, 1
      %p204 = por %p202, %p203
      %p206 = scmp.ne.s32.totalorder %s191, %s205
      %p207 = scmp.eq.s32.totalorder %s35, 0
      %p208 = por %p206, %p207
      %s209 = ssub.s32 %s29, %s36
      %p210 = scmp.eq.s32.totalorder %s209, 0
      %s212 = sadd.s32 %s211, 1
      %s213 = scalar_select %p210, %s211, %s212
      %p216 = pneg %p210
      %p217 = scmp.eq.s32.totalorder %s29, 1
      %p218 = por %p216, %p217
      %p219 = scmp.ne.s32.totalorder %s211, %s214
      %p220 = scmp.eq.s32.totalorder %s29, 0
      %p221 = por %p219, %p220
      %p222 = scmp.ne.s32.totalorder %s211, %s214
      %p223 = scmp.eq.s32.totalorder %s34, 1
      %p224 = por %p222, %p223
      %p225 = scmp.ne.s32.totalorder %s214, %s215
      %p226 = scmp.eq.s32.totalorder %s34, 0
      %p227 = por %p225, %p226
      %p228 = scmp.ne.s32.totalorder %s214, %s215
      %p229 = scmp.eq.s32.totalorder %s35, 1
      %p230 = por %p228, %p229
      %p232 = scmp.ne.s32.totalorder %s215, %s231
      %p233 = scmp.eq.s32.totalorder %s35, 0
      %p234 = por %p232, %p233
      %p235 = scmp.le.s32.totalorder 1, %s29
      %p236 = scmp.lt.s32.totalorder %s29, 3
      %p237 = pnand %p235, %p236
      %p238 = pneg %p237
      // Predicated region
      $region9: #{tpu_custom_call.1} parent=5 // pred_check
        _
      $region10: #{tpu_custom_call.1} parent=5 // pred_check_branch
        %240 = sbr.rel (%p237) target = $region12
      $region11: #{tpu_custom_call.1} parent=5 // pred_region
        %s241 = ssub.s32 %s29, 1
        // Predicated region
        $region13: #{tpu_custom_call.1} parent=11 // pred_check
          %p242 = pneg %p180
        $region14: #{tpu_custom_call.1} parent=11 // pred_check_branch
          %244 = sbr.rel (%p242) target = $region16
        $region15: #{tpu_custom_call.1} parent=11 // pred_region
          %s246 = ssub.s32 3072, 3072
          %247 = vsyncadd [#allocation9], %s246
          %s248 = sshll.u32 [#allocation10], 4
          %s249 = int_to_ptr.vmem [resolvable:$true] %s248
          %254 = dma.hbm_to_vmem [thread:$0]  %s6, 3072, %s249, [#allocation9], 192, 192, 12
        $region16: #{tpu_custom_call.1} parent=11 // pred_fallthru
          _
        // Predicated region
        $region17: #{tpu_custom_call.1} parent=11 // pred_check
          %p255 = pneg %p201
        $region18: #{tpu_custom_call.1} parent=11 // pred_check_branch
          %257 = sbr.rel (%p255) target = $region20
        $region19: #{tpu_custom_call.1} parent=11 // pred_region
          _
        $region20: #{tpu_custom_call.1} parent=11 // pred_fallthru
          _
      $region12: #{tpu_custom_call.1} parent=5 // pred_fallthru
        _
      %p258 = scmp.lt.s32.totalorder %s29, 2
      // Predicated region
      $region21: #{tpu_custom_call.1} parent=5 // pred_check
        %p259 = pneg %p258
      $region22: #{tpu_custom_call.1} parent=5 // pred_check_branch
        %261 = sbr.rel (%p259) target = $region24
      $region23: #{tpu_custom_call.1} parent=5 // pred_region
        // Predicated region
        $region25: #{tpu_custom_call.1} parent=23 // pred_check
          %p262 = pneg %p49
        $region26: #{tpu_custom_call.1} parent=23 // pred_check_branch
          %264 = sbr.rel (%p262) target = $region28
        $region27: #{tpu_custom_call.1} parent=23 // pred_region
          %s265 = sand.u32 %s39, 1
          %s266 = scalar_lea.sflag [#allocation6], %s265
          %s267 = sand.u32 %s39, 1
          %s268 = smul.addr %s267, 24
          %s269 = scalar_lea.vmem [#allocation5], %s268
          %s271 = ssub.s32 384, 384
          %272 = vsyncadd %s266, %s271
          %s273 = smul.addr %s29, 3
          %s274 = smul.addr %s273, 128
          %s275 = scalar_lea.hbm %s1, %s274
          %s277 = sshll.u32 %s269, 4
          %s278 = int_to_ptr.vmem [resolvable:$true] %s277
          %280 = dma.hbm_to_vmem [thread:$0]  %s275, 384, %s278, %s266
        $region28: #{tpu_custom_call.1} parent=23 // pred_fallthru
          _
        // Predicated region
        $region29: #{tpu_custom_call.1} parent=23 // pred_check
          %p281 = pneg %p75
        $region30: #{tpu_custom_call.1} parent=23 // pred_check_branch
          %283 = sbr.rel (%p281) target = $region32
        $region31: #{tpu_custom_call.1} parent=23 // pred_region
          %p284 = scmp.lt.s32.totalorder %s29, 1
          %s285 = scalar_select %p284, %s29, 1
          %s286 = smul.addr %s285, 8
          %s287 = scalar_lea.vmem %s2, %s286
        $region32: #{tpu_custom_call.1} parent=23 // pred_fallthru
          _
        // Predicated region
        $region33: #{tpu_custom_call.1} parent=23 // pred_check
          %p288 = pneg %p101
        $region34: #{tpu_custom_call.1} parent=23 // pred_check_branch
          %290 = sbr.rel (%p288) target = $region36
        $region35: #{tpu_custom_call.1} parent=23 // pred_region
          %p291 = scmp.lt.s32.totalorder %s29, 1
          %s292 = scalar_select %p291, %s29, 1
          %s293 = smul.addr %s292, 2
          %s294 = smul.addr %s293, 8
          %s295 = scalar_lea.vmem %s3, %s294
        $region36: #{tpu_custom_call.1} parent=23 // pred_fallthru
          _
        // Predicated region
        $region37: #{tpu_custom_call.1} parent=23 // pred_check
          %p296 = pneg %p127
        $region38: #{tpu_custom_call.1} parent=23 // pred_check_branch
          %298 = sbr.rel (%p296) target = $region40
        $region39: #{tpu_custom_call.1} parent=23 // pred_region
          %p299 = scmp.lt.s32.totalorder %s29, 1
          %s300 = scalar_select %p299, %s29, 1
          %s301 = smul.addr %s300, 2
          %s302 = scalar_lea.vmem %s4, %s301
        $region40: #{tpu_custom_call.1} parent=23 // pred_fallthru
          _
        // Predicated region
        $region41: #{tpu_custom_call.1} parent=23 // pred_check
          %p303 = pneg %p153
        $region42: #{tpu_custom_call.1} parent=23 // pred_check_branch
          %305 = sbr.rel (%p303) target = $region44
        $region43: #{tpu_custom_call.1} parent=23 // pred_region
          %s306 = sand.u32 %s29, 1
          %s307 = scalar_lea.sflag [#allocation9], %s306
          %s308 = sand.u32 %s143, 1
          %s309 = smul.addr %s308, 16
          %s310 = scalar_lea.vmem [#allocation8], %s309
          %s312 = ssub.s32 256, 256
          %313 = vsyncadd %s307, %s312
          %s314 = smul.addr %s29, 2
          %s315 = smul.addr %s314, 128
          %s316 = scalar_lea.hbm %s5, %s315
          %s317 = sshll.u32 %s310, 4
          %s318 = int_to_ptr.vmem [resolvable:$true] %s317
          %323 = dma.hbm_to_vmem [thread:$0]  %s316, 256, %s318, %s307, 128, 128, 8
        $region44: #{tpu_custom_call.1} parent=23 // pred_fallthru
          _
      $region24: #{tpu_custom_call.1} parent=5 // pred_fallthru
        _
      %p324 = scmp.le.s32.totalorder 1, %s29
      %p325 = scmp.lt.s32.totalorder %s29, 3
      %p326 = pnand %p324, %p325
      %p327 = pneg %p326
      // Predicated region
      $region45: #{tpu_custom_call.1} parent=5 // pred_check
        _
      $region46: #{tpu_custom_call.1} parent=5 // pred_check_branch
        %329 = sbr.rel (%p326) target = $region48
      $region47: #{tpu_custom_call.1} parent=5 // pred_region
        %s330 = ssub.s32 %s29, 1
        %s331 = sand.u32 %s42, 1
        %s332 = scalar_lea.sflag [#allocation6], %s331
        %s333 = sand.u32 %s42, 1
        %s334 = smul.addr %s333, 24
        %s335 = scalar_lea.vmem [#allocation5], %s334
        // Predicated region
        $region49: #{tpu_custom_call.1} parent=47 // pred_check
          %p336 = pneg %p55
        $region50: #{tpu_custom_call.1} parent=47 // pred_check_branch
          %338 = sbr.rel (%p336) target = $region52
        $region51: #{tpu_custom_call.1} parent=47 // pred_region
          %339 = dma.done %s332, 384
        $region52: #{tpu_custom_call.1} parent=47 // pred_fallthru
          _
        %s340 = sand.u32 %s34, 1
        %s341 = scalar_lea.sflag [#allocation9], %s340
        %s342 = sand.u32 %s146, 1
        %s343 = smul.addr %s342, 16
        %s344 = scalar_lea.vmem [#allocation8], %s343
        // Predicated region
        $region53: #{tpu_custom_call.1} parent=47 // pred_check
          %p345 = pneg %p159
        $region54: #{tpu_custom_call.1} parent=47 // pred_check_branch
          %347 = sbr.rel (%p345) target = $region56
        $region55: #{tpu_custom_call.1} parent=47 // pred_region
          %348 = dma.done %s341, 256
        $region56: #{tpu_custom_call.1} parent=47 // pred_fallthru
          _
        // Predicated region
        $region57: #{tpu_custom_call.1} parent=47 // pred_check
          %p349 = pneg %p180
        $region58: #{tpu_custom_call.1} parent=47 // pred_check_branch
          %351 = sbr.rel (%p349) target = $region60
        $region59: #{tpu_custom_call.1} parent=47 // pred_region
          %352 = dma.done [#allocation9], 3072
        $region60: #{tpu_custom_call.1} parent=47 // pred_fallthru
          _
        %s353 = sand.u32 %s42, 1
        %s354 = scalar_lea.sflag [#allocation6], %s353
        %s355 = sand.u32 %s42, 1
        %s356 = smul.addr %s355, 24
        %s357 = scalar_lea.vmem [#allocation5], %s356
        %p358 = pneg %p55
        %p359 = pneg %p52
        %p360 = scmp.lt.s32.totalorder %s34, 1
        %s361 = scalar_select %p360, %s34, 1
        %s362 = smul.addr %s361, 8
        %s363 = scalar_lea.vmem %s2, %s362
        %p364 = pneg %p81
        %p365 = pneg %p78
        %p366 = scmp.lt.s32.totalorder %s34, 1
        %s367 = scalar_select %p366, %s34, 1
        %s368 = smul.addr %s367, 2
        %s369 = smul.addr %s368, 8
        %s370 = scalar_lea.vmem %s3, %s369
        %p371 = pneg %p107
        %p372 = pneg %p104
        %p373 = scmp.lt.s32.totalorder %s34, 1
        %s374 = scalar_select %p373, %s34, 1
        %s375 = smul.addr %s374, 2
        %s376 = scalar_lea.vmem %s4, %s375
        %p377 = pneg %p133
        %p378 = pneg %p130
        %s379 = sand.u32 %s34, 1
        %s380 = scalar_lea.sflag [#allocation9], %s379
        %s381 = sand.u32 %s146, 1
        %s382 = smul.addr %s381, 16
        %s383 = scalar_lea.vmem [#allocation8], %s382
        %p384 = pneg %p159
        %p385 = pneg %p156
        %p386 = pneg %p180
        %p387 = pneg %p177
        %p388 = pneg %p201
        %p389 = pneg %p198
        %p390 = pneg %p227
        %p391 = pneg %p224
        %s392 = sand.u32 %s214, 1
        %s393 = scalar_lea.sflag [#allocation7], %s392
        %s394 = sand.u32 %s214, 1
        %s395 = smul.addr %s394, 8
        %s396 = scalar_lea.vmem [#allocation11], %s395
        %p397 = scmp.lt.s32.totalorder %s34, 1
        %s398 = scalar_select %p397, %s34, 1
        %s399 = smul.addr %s398, 8
        %s400 = scalar_lea.vmem %s2, %s399
        %p401 = scmp.lt.s32.totalorder %s34, 1
        %s402 = scalar_select %p401, %s34, 1
        %s403 = smul.addr %s402, 2
        %s404 = smul.addr %s403, 8
        %s405 = scalar_lea.vmem %s3, %s404
        %p406 = scmp.lt.s32.totalorder %s34, 1
        %s407 = scalar_select %p406, %s34, 1
        %s408 = smul.addr %s407, 2
        %s409 = scalar_lea.vmem %s4, %s408
        %v411 = vld [vmem:[%s335] sm:$0xff]
        %v412 = vld [vmem:[%s335 + $0x8] sm:$0xff]
        %v413 = vld [vmem:[%s335 + $0x10] sm:$0xff]
        %v414 = vxor.u32 %v411, 2147483648
        %v415 = vmul.f32 %v414, 1.442695
        %v416 = vpow.pop %v415
        %v417 = vadd.f32 %v416, 1.0
        %v418 = vrcp.pop %v417
        %v419 = vmul.f32 1.0, %v418
        %v420 = vtanh.pop %v413
        %v421 = vmul.f32 %v419, %v420
        %v422 = vxor.u32 %v412, 2147483648
        %v423 = vmul.f32 %v422, 1.442695
        %v424 = vpow.pop %v423
        %v425 = vadd.f32 %v424, 1.0
        %v426 = vrcp.pop %v425
        %v427 = vmul.f32 1.0, %v426
        %v428 = vtanh.pop %v421
        %v429 = vmul.f32 %v427, %v428
        %v430 = vld [vmem:[%s400] sm:$0xff]
        %vm431 = vcmp.eq.s32.totalorder %v430, 0
        %v432 = vsel %vm431, 1, 0
        %433 = vset.pattern.permute.xlu0 0
        %434 = vperm.xlu0 %433, %v432
        %v435 = vpop.permute.xlu0 %434
        %vm436 = vcmp.eq.s32.totalorder %v435, 1
        %v437 = vsel %vm436, %v429, 0.0
        %v438 = vsel %vm436, %v421, 0.0
        %439 = vst [vmem:[#allocation2] sm:$0xff] %v437
        %440 = vst [vmem:[#allocation2 + $0x8] sm:$0xff] %v438
        %s441 = sld [smem:[#allocation4 + %s34]]
        // While loop
        $region61: #{tpu_custom_call.1} parent=47 // loop_pre_header
          _
        $region62: #{tpu_custom_call.1} parent=47 // loop_header
          %s443 = sphi 1, %s445
          %p444 = scmp.ge.s32.totalorder %s443, %s441
        $region63: #{tpu_custom_call.1} parent=47 // loop_header_branch
          %447 = sbr.rel (%p444) target = $region67
        $region64: #{tpu_custom_call.1} parent=47 // loop_body
          %s448 = ssub.s32 %s443, 1
          %s449 = smul.u32 %s448, 8
          %s450 = scalar_lea.vmem %s405, %s449
          %v451 = vld [vmem:[%s450] sm:$0xff]
          %s452 = scalar_lea.vmem %s409, %s448
          %v453 = vld [vmem:[%s452] sm:$0x1]
          %s454 = scalar_lea.vmem %s344, %s449 [#allocation8]
          %v455 = vld [vmem:[%s454] sm:$0xff]
          %v456 = vld [vmem:[#allocation2] sm:$0xff]
          %v457 = vld [vmem:[#allocation2 + $0x8] sm:$0xff]
          %v458 = vlaneseq
          %v459 = vand.u32 %v458, 127
          %460 = vset.pattern.permute.xlu0 0
          %461 = vperm.xlu0 %460, %v451
          %v462 = vpop.permute.xlu0 %461
          %vm463 = vcmp.eq.s32.totalorder %v462, %v459
          %v464 = vsel %vm463, 1.0, 0.0
          %v465 = vpack.c.bf16 %v464, %v464
          %v466 = vpack.c.bf16 %v456, %v456
          %v467 = vpack.c.bf16 %v457, %v457
          %vm468 = vcmask 64512
          %v470 = vsel %vm468, %v465, 0
          %vm472 = vcmask 1043456
          %v474 = vsel %vm472, %v466, 0
          %v477 = vsel %vm472, %v467, 0
          %479 = vmatprep.subr.bf16.mxu0 %v477
          %480 = vmatpush1.bf16.msra.mxu0 %v474
          %481 = vmatprep.subr.bf16.mxu0 0
          %482 = vmatpush1.bf16.msra.mxu0 0
          %483 = vmatprep.subr.bf16.mxu0 0
          %484 = vmatpush1.bf16.msra.mxu0 0
          %485 = vmatprep.subr.bf16.mxu0 0
          %486 = vmatpush1.bf16.msra.mxu0 0
          %487 = vmatprep.subr.bf16.mxu0 0
          %488 = vmatpush1.bf16.msra.mxu0 0
          %489 = vmatprep.subr.bf16.mxu0 0
          %490 = vmatpush1.bf16.msra.mxu0 0
          %491 = vmatprep.subr.bf16.mxu0 0
          %492 = vmatpush1.bf16.msra.mxu0 0
          %493 = vmatprep.subr.bf16.mxu0 0
          %494 = vmatpush1.bf16.msra.mxu0 0
          %495 = vmatprep.subr.bf16.mxu0 0
          %496 = vmatpush1.bf16.msra.mxu0 0
          %497 = vmatprep.subr.bf16.mxu0 0
          %498 = vmatpush1.bf16.msra.mxu0 0
          %499 = vmatprep.subr.bf16.mxu0 0
          %500 = vmatpush1.bf16.msra.mxu0 0
          %501 = vmatprep.subr.bf16.mxu0 0
          %502 = vmatpush1.bf16.msra.mxu0 0
          %503 = vmatprep.subr.bf16.mxu0 0
          %504 = vmatpush1.bf16.msra.mxu0 0
          %505 = vmatprep.subr.bf16.mxu0 0
          %506 = vmatpush1.bf16.msra.mxu0 0
          %507 = vmatprep.subr.bf16.mxu0 0
          %508 = vmatpush1.bf16.msra.mxu0 0
          %509 = vmatprep.subr.bf16.mxu0 0
          %510 = vmatpush1.bf16.msra.mxu0 0
          %511 = vmatprep.mubr.bf16.mxu0 0
          %512 = vmatmul.mubr.bf16.gmra.mrb[0].mxu0 %v470
          %v513 = vpop.f32.mrb[0].mxu0
          %v514 = vadd.f32 0.0, %v513
          %v515 = vpop.f32.mrb[0].mxu0
          %v516 = vadd.f32 0.0, %v515
          %v517 = vpop.f32.mrb[0].mxu0
          %v518 = vpop.f32.mrb[0].mxu0
          %519 = vdwg.mxu0
          %v520 = vpack.c.bf16 %v514, %v514
          %v521 = vld [vmem:[%s7] sm:$0xf]
          %v522 = vld [vmem:[%s7 + $0x4] sm:$0xf]
          %v523 = vld [vmem:[%s7 + $0x8] sm:$0xf]
          %v524 = vld [vmem:[%s7 + $0xc] sm:$0xf]
          %v525 = vld [vmem:[%s7 + $0x10] sm:$0xf]
          %v526 = vld [vmem:[%s7 + $0x14] sm:$0xf]
          %v527 = vld [vmem:[%s7 + $0x18] sm:$0xf]
          %v528 = vld [vmem:[%s7 + $0x1c] sm:$0xf]
          %v529 = vld [vmem:[%s7 + $0x20] sm:$0xf]
          %v530 = vld [vmem:[%s7 + $0x24] sm:$0xf]
          %v531 = vld [vmem:[%s7 + $0x28] sm:$0xf]
          %v532 = vld [vmem:[%s7 + $0x2c] sm:$0xf]
          %v533 = vld [vmem:[%s7 + $0x30] sm:$0xf]
          %v534 = vld [vmem:[%s7 + $0x34] sm:$0xf]
          %v535 = vld [vmem:[%s7 + $0x38] sm:$0xf]
          %v536 = vld [vmem:[%s7 + $0x3c] sm:$0xf]
          %v553 = vunpack.c.l.b16 %v521
          %v554 = vunpack.c.l.b16 %v522
          %v555 = vunpack.c.l.b16 %v523
          %v556 = vunpack.c.l.b16 %v524
          %v557 = vunpack.c.l.b16 %v525
          %v558 = vunpack.c.l.b16 %v526
          %v559 = vunpack.c.l.b16 %v527
          %v560 = vunpack.c.l.b16 %v528
          %v561 = vunpack.c.l.b16 %v529
          %v562 = vunpack.c.l.b16 %v530
          %v563 = vunpack.c.l.b16 %v531
          %v564 = vunpack.c.l.b16 %v532
          %v565 = vunpack.c.l.b16 %v533
          %v566 = vunpack.c.l.b16 %v534
          %v567 = vunpack.c.l.b16 %v535
          %v568 = vunpack.c.l.b16 %v536
          %v569 = vpack.c.b16 %v554, %v553
          %v570 = vpack.c.b16 %v556, %v555
          %v571 = vpack.c.b16 %v558, %v557
          %v572 = vpack.c.b16 %v560, %v559
          %v573 = vpack.c.b16 %v562, %v561
          %v574 = vpack.c.b16 %v564, %v563
          %v575 = vpack.c.b16 %v566, %v565
          %v576 = vpack.c.b16 %v568, %v567
          %585 = vmatprep.subr.bf16.mxu0 0
          %586 = vmatpush1.bf16.msra.mxu0 %v569
          %587 = vmatprep.subr.bf16.mxu0 0
          %588 = vmatpush1.bf16.msra.mxu0 %v570
          %589 = vmatprep.subr.bf16.mxu0 0
          %590 = vmatpush1.bf16.msra.mxu0 %v571
          %591 = vmatprep.subr.bf16.mxu0 0
          %592 = vmatpush1.bf16.msra.mxu0 %v572
          %593 = vmatprep.subr.bf16.mxu0 0
          %594 = vmatpush1.bf16.msra.mxu0 %v573
          %595 = vmatprep.subr.bf16.mxu0 0
          %596 = vmatpush1.bf16.msra.mxu0 %v574
          %597 = vmatprep.subr.bf16.mxu0 0
          %598 = vmatpush1.bf16.msra.mxu0 %v575
          %599 = vmatprep.subr.bf16.mxu0 0
          %600 = vmatpush1.bf16.msra.mxu0 %v576
          %601 = vmatprep.subr.bf16.mxu0 0
          %602 = vmatpush1.bf16.msra.mxu0 0
          %603 = vmatprep.subr.bf16.mxu0 0
          %604 = vmatpush1.bf16.msra.mxu0 0
          %605 = vmatprep.subr.bf16.mxu0 0
          %606 = vmatpush1.bf16.msra.mxu0 0
          %607 = vmatprep.subr.bf16.mxu0 0
          %608 = vmatpush1.bf16.msra.mxu0 0
          %609 = vmatprep.subr.bf16.mxu0 0
          %610 = vmatpush1.bf16.msra.mxu0 0
          %611 = vmatprep.subr.bf16.mxu0 0
          %612 = vmatpush1.bf16.msra.mxu0 0
          %613 = vmatprep.subr.bf16.mxu0 0
          %614 = vmatpush1.bf16.msra.mxu0 0
          %615 = vmatprep.subr.bf16.mxu0 0
          %616 = vmatpush1.bf16.msra.mxu0 0
          %617 = vmatprep.mubr.bf16.mxu0 0
          %618 = vmatmul.mubr.bf16.gmra.mrb[0].mxu0 %v520
          %v619 = vpop.f32.mrb[0].mxu0
          %v620 = vadd.f32 0.0, %v619
          %v621 = vpop.f32.mrb[0].mxu0
          %v622 = vpop.f32.mrb[0].mxu0
          %v623 = vpop.f32.mrb[0].mxu0
          %624 = vdwg.mxu0
          %v625 = vadd.f32 %v455, %v620
          %v626 = vxor.u32 %v625, 2147483648
          %v627 = vmul.f32 %v626, 1.442695
          %v628 = vpow.pop %v627
          %v629 = vadd.f32 %v628, 1.0
          %v630 = vrcp.pop %v629
          %v631 = vmul.f32 1.0, %v630
          %v632 = vmul.f32 %v631, %v516
          %v633 = vpack.c.bf16 %v632, %v632
          %v634 = vlaneseq
          %v635 = vshrl.u32 %v634, 7
          %v636 = vlaneseq
          %v637 = vshrl.u32 %v636, 7
          %v638 = vsub.s32 0, %v637
          %v639 = vrot.slane %v453, %v638
          %vm640 = vcmp.eq.s32.totalorder %v639, %v635
          %v641 = vsel %vm640, 1.0, 0.0
          %v642 = vpack.c.bf16 %v641, %v641
          %v644 = vsel %vm468, %v642, 0
          %v647 = vsel %vm472, %v520, 0
          %v650 = vsel %vm472, %v633, 0
          %652 = vmatprep.subr.bf16.mxu0 %v650
          %653 = vmatpush1.bf16.msra.mxu0 %v647
          %654 = vmatprep.subr.bf16.mxu0 0
          %655 = vmatpush1.bf16.msra.mxu0 0
          %656 = vmatprep.subr.bf16.mxu0 0
          %657 = vmatpush1.bf16.msra.mxu0 0
          %658 = vmatprep.subr.bf16.mxu0 0
          %659 = vmatpush1.bf16.msra.mxu0 0
          %660 = vmatprep.subr.bf16.mxu0 0
          %661 = vmatpush1.bf16.msra.mxu0 0
          %662 = vmatprep.subr.bf16.mxu0 0
          %663 = vmatpush1.bf16.msra.mxu0 0
          %664 = vmatprep.subr.bf16.mxu0 0
          %665 = vmatpush1.bf16.msra.mxu0 0
          %666 = vmatprep.subr.bf16.mxu0 0
          %667 = vmatpush1.bf16.msra.mxu0 0
          %668 = vmatprep.subr.bf16.mxu0 0
          %669 = vmatpush1.bf16.msra.mxu0 0
          %670 = vmatprep.subr.bf16.mxu0 0
          %671 = vmatpush1.bf16.msra.mxu0 0
          %672 = vmatprep.subr.bf16.mxu0 0
          %673 = vmatpush1.bf16.msra.mxu0 0
          %674 = vmatprep.subr.bf16.mxu0 0
          %675 = vmatpush1.bf16.msra.mxu0 0
          %676 = vmatprep.subr.bf16.mxu0 0
          %677 = vmatpush1.bf16.msra.mxu0 0
          %678 = vmatprep.subr.bf16.mxu0 0
          %679 = vmatpush1.bf16.msra.mxu0 0
          %680 = vmatprep.subr.bf16.mxu0 0
          %681 = vmatpush1.bf16.msra.mxu0 0
          %682 = vmatprep.subr.bf16.mxu0 0
          %683 = vmatpush1.bf16.msra.mxu0 0
          %684 = vmatprep.mubr.bf16.mxu0 0
          %685 = vmatmul.mubr.bf16.gmra.mrb[0].mxu0 %v644
          %v686 = vpop.f32.mrb[0].mxu0
          %v687 = vadd.f32 0.0, %v686
          %v688 = vpop.f32.mrb[0].mxu0
          %v689 = vadd.f32 0.0, %v688
          %v690 = vpop.f32.mrb[0].mxu0
          %v691 = vpop.f32.mrb[0].mxu0
          %692 = vdwg.mxu0
          %v693 = vpack.c.bf16 %v687, %v687
          %v694 = vld [vmem:[#allocation10] sm:$0xff]
          %v695 = vld [vmem:[#allocation10 + $0x8] sm:$0xf]
          %v696 = vld [vmem:[#allocation10 + $0xc] sm:$0xff]
          %v697 = vld [vmem:[#allocation10 + $0x14] sm:$0xf]
          %v698 = vld [vmem:[#allocation10 + $0x18] sm:$0xff]
          %v699 = vld [vmem:[#allocation10 + $0x20] sm:$0xf]
          %v700 = vld [vmem:[#allocation10 + $0x24] sm:$0xff]
          %v701 = vld [vmem:[#allocation10 + $0x2c] sm:$0xf]
          %v702 = vld [vmem:[#allocation10 + $0x30] sm:$0xff]
          %v703 = vld [vmem:[#allocation10 + $0x38] sm:$0xf]
          %v704 = vld [vmem:[#allocation10 + $0x3c] sm:$0xff]
          %v705 = vld [vmem:[#allocation10 + $0x44] sm:$0xf]
          %v706 = vld [vmem:[#allocation10 + $0x48] sm:$0xff]
          %v707 = vld [vmem:[#allocation10 + $0x50] sm:$0xf]
          %v708 = vld [vmem:[#allocation10 + $0x54] sm:$0xff]
          %v709 = vld [vmem:[#allocation10 + $0x5c] sm:$0xf]
          %v710 = vld [vmem:[#allocation10 + $0x60] sm:$0xff]
          %v711 = vld [vmem:[#allocation10 + $0x68] sm:$0xf]
          %v712 = vld [vmem:[#allocation10 + $0x6c] sm:$0xff]
          %v713 = vld [vmem:[#allocation10 + $0x74] sm:$0xf]
          %v714 = vld [vmem:[#allocation10 + $0x78] sm:$0xff]
          %v715 = vld [vmem:[#allocation10 + $0x80] sm:$0xf]
          %v716 = vld [vmem:[#allocation10 + $0x84] sm:$0xff]
          %v717 = vld [vmem:[#allocation10 + $0x8c] sm:$0xf]
          %v718 = vld [vmem:[#allocation10 + $0x90] sm:$0xff]
          %v719 = vld [vmem:[#allocation10 + $0x98] sm:$0xf]
          %v720 = vld [vmem:[#allocation10 + $0x9c] sm:$0xff]
          %v721 = vld [vmem:[#allocation10 + $0xa4] sm:$0xf]
          %v722 = vld [vmem:[#allocation10 + $0xa8] sm:$0xff]
          %v723 = vld [vmem:[#allocation10 + $0xb0] sm:$0xf]
          %v724 = vld [vmem:[#allocation10 + $0xb4] sm:$0xff]
          %v725 = vld [vmem:[#allocation10 + $0xbc] sm:$0xf]
          %v758 = vunpack.c.l.b16 %v694
          %v759 = vunpack.c.h.b16 %v694
          %v760 = vunpack.c.l.b16 %v695
          %v761 = vunpack.c.l.b16 %v696
          %v762 = vunpack.c.h.b16 %v696
          %v763 = vunpack.c.l.b16 %v697
          %v764 = vunpack.c.l.b16 %v698
          %v765 = vunpack.c.h.b16 %v698
          %v766 = vunpack.c.l.b16 %v699
          %v767 = vunpack.c.l.b16 %v700
          %v768 = vunpack.c.h.b16 %v700
          %v769 = vunpack.c.l.b16 %v701
          %v770 = vunpack.c.l.b16 %v702
          %v771 = vunpack.c.h.b16 %v702
          %v772 = vunpack.c.l.b16 %v703
          %v773 = vunpack.c.l.b16 %v704
          %v774 = vunpack.c.h.b16 %v704
          %v775 = vunpack.c.l.b16 %v705
          %v776 = vunpack.c.l.b16 %v706
          %v777 = vunpack.c.h.b16 %v706
          %v778 = vunpack.c.l.b16 %v707
          %v779 = vunpack.c.l.b16 %v708
          %v780 = vunpack.c.h.b16 %v708
          %v781 = vunpack.c.l.b16 %v709
          %v782 = vunpack.c.l.b16 %v710
          %v783 = vunpack.c.h.b16 %v710
          %v784 = vunpack.c.l.b16 %v711
          %v785 = vunpack.c.l.b16 %v712
          %v786 = vunpack.c.h.b16 %v712
          %v787 = vunpack.c.l.b16 %v713
          %v788 = vunpack.c.l.b16 %v714
          %v789 = vunpack.c.h.b16 %v714
          %v790 = vunpack.c.l.b16 %v715
          %v791 = vunpack.c.l.b16 %v716
          %v792 = vunpack.c.h.b16 %v716
          %v793 = vunpack.c.l.b16 %v717
          %v794 = vunpack.c.l.b16 %v718
          %v795 = vunpack.c.h.b16 %v718
          %v796 = vunpack.c.l.b16 %v719
          %v797 = vunpack.c.l.b16 %v720
          %v798 = vunpack.c.h.b16 %v720
          %v799 = vunpack.c.l.b16 %v721
          %v800 = vunpack.c.l.b16 %v722
          %v801 = vunpack.c.h.b16 %v722
          %v802 = vunpack.c.l.b16 %v723
          %v803 = vunpack.c.l.b16 %v724
          %v804 = vunpack.c.h.b16 %v724
          %v805 = vunpack.c.l.b16 %v725
          %v806 = vpack.c.b16 %v761, %v758
          %v807 = vpack.c.b16 %v762, %v759
          %v808 = vpack.c.b16 %v763, %v760
          %v809 = vpack.c.b16 %v767, %v764
          %v810 = vpack.c.b16 %v768, %v765
          %v811 = vpack.c.b16 %v769, %v766
          %v812 = vpack.c.b16 %v773, %v770
          %v813 = vpack.c.b16 %v774, %v771
          %v814 = vpack.c.b16 %v775, %v772
          %v815 = vpack.c.b16 %v779, %v776
          %v816 = vpack.c.b16 %v780, %v777
          %v817 = vpack.c.b16 %v781, %v778
          %v818 = vpack.c.b16 %v785, %v782
          %v819 = vpack.c.b16 %v786, %v783
          %v820 = vpack.c.b16 %v787, %v784
          %v821 = vpack.c.b16 %v791, %v788
          %v822 = vpack.c.b16 %v792, %v789
          %v823 = vpack.c.b16 %v793, %v790
          %v824 = vpack.c.b16 %v797, %v794
          %v825 = vpack.c.b16 %v798, %v795
          %v826 = vpack.c.b16 %v799, %v796
          %v827 = vpack.c.b16 %v803, %v800
          %v828 = vpack.c.b16 %v804, %v801
          %v829 = vpack.c.b16 %v805, %v802
          %854 = vmatprep.subr.bf16.mxu0 %v807
          %855 = vmatpush1.bf16.msra.mxu0 %v806
          %856 = vmatprep.subr.bf16.mxu0 %v810
          %857 = vmatpush1.bf16.msra.mxu0 %v809
          %858 = vmatprep.subr.bf16.mxu0 %v813
          %859 = vmatpush1.bf16.msra.mxu0 %v812
          %860 = vmatprep.subr.bf16.mxu0 %v816
          %861 = vmatpush1.bf16.msra.mxu0 %v815
          %862 = vmatprep.subr.bf16.mxu0 %v819
          %863 = vmatpush1.bf16.msra.mxu0 %v818
          %864 = vmatprep.subr.bf16.mxu0 %v822
          %865 = vmatpush1.bf16.msra.mxu0 %v821
          %866 = vmatprep.subr.bf16.mxu0 %v825
          %867 = vmatpush1.bf16.msra.mxu0 %v824
          %868 = vmatprep.subr.bf16.mxu0 %v828
          %869 = vmatpush1.bf16.msra.mxu0 %v827
          %870 = vmatprep.subr.bf16.mxu0 0
          %871 = vmatpush1.bf16.msra.mxu0 0
          %872 = vmatprep.subr.bf16.mxu0 0
          %873 = vmatpush1.bf16.msra.mxu0 0
          %874 = vmatprep.subr.bf16.mxu0 0
          %875 = vmatpush1.bf16.msra.mxu0 0
          %876 = vmatprep.subr.bf16.mxu0 0
          %877 = vmatpush1.bf16.msra.mxu0 0
          %878 = vmatprep.subr.bf16.mxu0 0
          %879 = vmatpush1.bf16.msra.mxu0 0
          %880 = vmatprep.subr.bf16.mxu0 0
          %881 = vmatpush1.bf16.msra.mxu0 0
          %882 = vmatprep.subr.bf16.mxu0 0
          %883 = vmatpush1.bf16.msra.mxu0 0
          %884 = vmatprep.subr.bf16.mxu0 0
          %885 = vmatpush1.bf16.msra.mxu0 0
          %886 = vmatprep.mubr.bf16.mxu0 0
          %887 = vmatmul.mubr.bf16.gmra.mrb[0].mxu0 %v693
          %v888 = vpop.f32.mrb[0].mxu0
          %v889 = vadd.f32 0.0, %v888
          %v890 = vpop.f32.mrb[0].mxu0
          %v891 = vadd.f32 0.0, %v890
          %v892 = vpop.f32.mrb[0].mxu0
          %v893 = vpop.f32.mrb[0].mxu0
          %894 = vdwg.mxu0
          %895 = vmatprep.subr.bf16.mxu0 0
          %896 = vmatpush1.bf16.msra.mxu0 %v808
          %897 = vmatprep.subr.bf16.mxu0 0
          %898 = vmatpush1.bf16.msra.mxu0 %v811
          %899 = vmatprep.subr.bf16.mxu0 0
          %900 = vmatpush1.bf16.msra.mxu0 %v814
          %901 = vmatprep.subr.bf16.mxu0 0
          %902 = vmatpush1.bf16.msra.mxu0 %v817
          %903 = vmatprep.subr.bf16.mxu0 0
          %904 = vmatpush1.bf16.msra.mxu0 %v820
          %905 = vmatprep.subr.bf16.mxu0 0
          %906 = vmatpush1.bf16.msra.mxu0 %v823
          %907 = vmatprep.subr.bf16.mxu0 0
          %908 = vmatpush1.bf16.msra.mxu0 %v826
          %909 = vmatprep.subr.bf16.mxu0 0
          %910 = vmatpush1.bf16.msra.mxu0 %v829
          %911 = vmatprep.subr.bf16.mxu0 0
          %912 = vmatpush1.bf16.msra.mxu0 0
          %913 = vmatprep.subr.bf16.mxu0 0
          %914 = vmatpush1.bf16.msra.mxu0 0
          %915 = vmatprep.subr.bf16.mxu0 0
          %916 = vmatpush1.bf16.msra.mxu0 0
          %917 = vmatprep.subr.bf16.mxu0 0
          %918 = vmatpush1.bf16.msra.mxu0 0
          %919 = vmatprep.subr.bf16.mxu0 0
          %920 = vmatpush1.bf16.msra.mxu0 0
          %921 = vmatprep.subr.bf16.mxu0 0
          %922 = vmatpush1.bf16.msra.mxu0 0
          %923 = vmatprep.subr.bf16.mxu0 0
          %924 = vmatpush1.bf16.msra.mxu0 0
          %925 = vmatprep.subr.bf16.mxu0 0
          %926 = vmatpush1.bf16.msra.mxu0 0
          %927 = vmatprep.mubr.bf16.mxu0 0
          %928 = vmatmul.mubr.bf16.gmra.mrb[0].mxu0 %v693
          %v929 = vpop.f32.mrb[0].mxu0
          %v930 = vadd.f32 0.0, %v929
          %v931 = vpop.f32.mrb[0].mxu0
          %v932 = vpop.f32.mrb[0].mxu0
          %v933 = vpop.f32.mrb[0].mxu0
          %934 = vdwg.mxu0
          %v935 = vld [vmem:[%s335] sm:$0xff]
          %v936 = vadd.f32 %v935, %v889
          %v937 = vxor.u32 %v936, 2147483648
          %v938 = vmul.f32 %v937, 1.442695
          %v939 = vpow.pop %v938
          %v940 = vadd.f32 %v939, 1.0
          %v941 = vrcp.pop %v940
          %v942 = vmul.f32 1.0, %v941
          %v943 = vld [vmem:[%s335 + $0x8] sm:$0xff]
          %v944 = vadd.f32 %v943, %v891
          %v945 = vxor.u32 %v944, 2147483648
          %v946 = vmul.f32 %v945, 1.442695
          %v947 = vpow.pop %v946
          %v948 = vadd.f32 %v947, 1.0
          %v949 = vrcp.pop %v948
          %v950 = vmul.f32 1.0, %v949
          %v951 = vld [vmem:[%s335 + $0x10] sm:$0xff]
          %v952 = vadd.f32 %v951, %v930
          %v953 = vtanh.pop %v952
          %v954 = vmul.f32 %v942, %v953
          %v955 = vadd.f32 %v954, %v689
          %v956 = vtanh.pop %v955
          %v957 = vmul.f32 %v950, %v956
          %v958 = vld [vmem:[%s400] sm:$0xff]
          %v959 = vstv %s443
          %vm960 = vcmp.eq.s32.totalorder %v958, %v959
          %v961 = vsel %vm960, 1, 0
          %962 = vset.pattern.permute.xlu0 0
          %963 = vperm.xlu0 %962, %v961
          %v964 = vpop.permute.xlu0 %963
          %vm965 = vcmp.eq.s32.totalorder %v964, 1
          %v966 = vsel %vm965, %v957, %v456
          %v967 = vsel %vm965, %v955, %v457
          %968 = vst [vmem:[#allocation2] sm:$0xff] %v966
          %969 = vst [vmem:[#allocation2 + $0x8] sm:$0xff] %v967
        $region65: #{tpu_custom_call.1} parent=47 // loop_footer
          %s445 = sadd.s32 %s443, 1
        $region66: #{tpu_custom_call.1} parent=47 // loop_footer_branch
          %442 = sbr.rel target = $region62
        $region67: #{tpu_custom_call.1} parent=47 // loop_exit
          _
        %v970 = vld [vmem:[#allocation2] sm:$0xff]
        %971 = vst [vmem:[%s396] sm:$0xff] %v970
        %s972 = sand.u32 %s214, 1
        %s973 = scalar_lea.sflag [#allocation7], %s972
        %s974 = sand.u32 %s214, 1
        %s975 = smul.addr %s974, 8
        %s976 = scalar_lea.vmem [#allocation11], %s975
        // Predicated region
        $region68: #{tpu_custom_call.1} parent=47 // pred_check
          %p977 = pneg %p224
        $region69: #{tpu_custom_call.1} parent=47 // pred_check_branch
          %979 = sbr.rel (%p977) target = $region71
        $region70: #{tpu_custom_call.1} parent=47 // pred_region
          %s981 = ssub.s32 128, 128
          %982 = vsyncadd %s973, %s981
          %s983 = smul.addr %s34, 128
          %s984 = scalar_lea.hbm %s8, %s983
          %s986 = sshll.u32 %s976, 4
          %s987 = int_to_ptr.vmem [resolvable:$true] %s986
          %989 = dma.vmem_to_hbm [thread:$0]  %s987, 128, %s984, %s973
        $region71: #{tpu_custom_call.1} parent=47 // pred_fallthru
          _
      $region48: #{tpu_custom_call.1} parent=5 // pred_fallthru
        _
      %p990 = scmp.le.s32.totalorder 2, %s29
      // Predicated region
      $region72: #{tpu_custom_call.1} parent=5 // pred_check
        %p991 = pneg %p990
      $region73: #{tpu_custom_call.1} parent=5 // pred_check_branch
        %993 = sbr.rel (%p991) target = $region75
      $region74: #{tpu_custom_call.1} parent=5 // pred_region
        %s994 = ssub.s32 %s29, 2
        // Predicated region
        $region76: #{tpu_custom_call.1} parent=74 // pred_check
          %p995 = pneg %p230
        $region77: #{tpu_custom_call.1} parent=74 // pred_check_branch
          %997 = sbr.rel (%p995) target = $region79
        $region78: #{tpu_custom_call.1} parent=74 // pred_region
          %s998 = sand.u32 %s215, 1
          %s999 = scalar_lea.sflag [#allocation7], %s998
          %s1000 = sand.u32 %s215, 1
          %s1001 = smul.addr %s1000, 8
          %s1002 = scalar_lea.vmem [#allocation11], %s1001
          %1003 = dma.done %s999, 128
        $region79: #{tpu_custom_call.1} parent=74 // pred_fallthru
          _
      $region75: #{tpu_custom_call.1} parent=5 // pred_fallthru
        _
    $region6: #{tpu_custom_call.1} parent=1 // loop_footer
      %s33 = sadd.s32 1, %s29
    $region7: #{tpu_custom_call.1} parent=1 // loop_footer_branch
      %28 = sbr.rel target = $region3
    $region8: #{tpu_custom_call.1} parent=1 // loop_exit
      _
    %1004 = vsyncpa [#allocation6], 1
    %s1005 = scalar_lea.sflag [#allocation6], 1
    %1006 = vsyncpa %s1005, 1
    %1007 = vsyncpa [#allocation9], 1
    %s1008 = scalar_lea.sflag [#allocation9], 1
    %1009 = vsyncpa %s1008, 1
    %1010 = vsyncpa [#allocation7], 1
    %s1011 = scalar_lea.sflag [#allocation7], 1
    %1012 = vsyncpa %s1011, 1

</llo_original>
